<compile_context>
chip_gen: v6e
topology: v6e:2x2x1
jax: 0.10.0
libtpu: 0.0.40
codegen_flags: <defaults>
</compile_context>

<pallas_src>
import jax
import jax.numpy as jnp
from jax.experimental import pallas as pl
from jax.experimental.pallas import tpu as pltpu


def _attention_readout_kernel(x_ref, w1_ref, b1_ref, w2_ref, out_ref):
    # x_ref:  [TB, N, D]   TB batch elements per grid step, native dtype
    # w1_ref: [D, Hp]      first Linear weight (H zero-padded to Hp), x dtype
    # b1_ref: [1, Hp]      first Linear bias (zero-padded), compute dtype
    # w2_ref: [Hp, 1]      second Linear (H -> 1) weight (zero-padded), compute dtype
    # out_ref:[TB, D]
    TB, N, D = x_ref.shape
    cdt = b1_ref.dtype

    x = x_ref[...]                                            # [TB, N, D] native dtype

    # --- attention_model: Linear(D,H) -> Swish -> Linear(H,1) ---------------
    # One MXU matmul over all TB*N node rows, f32 accumulation.
    # (x.reshape is a free view when N is a multiple of the sublane pack.)
    h = jnp.dot(x.reshape(TB * N, D), w1_ref[...],
                preferred_element_type=jnp.float32)           # [TB*N, Hp] f32
    h = h.astype(cdt) + b1_ref[...]                           # epilogue in compute dtype
    h = h * jax.nn.sigmoid(h)                                 # Swish (EUP)

    # Second Linear (H -> 1) on the MXU.  b2 omitted: softmax over the node
    # axis is shift-invariant, so the constant bias is a mathematical no-op.
    scores = jnp.dot(h, w2_ref[...],
                     preferred_element_type=jnp.float32)      # [TB*N, 1] f32
    scores = scores.reshape(TB, N, 1)                         # tiny reshape only

    # --- softmax over the node axis (dim=1 in the PyTorch module), f32 ------
    m = jnp.max(scores, axis=1, keepdims=True)                # [TB, 1, 1]
    e = jnp.exp(scores - m)
    denom = jnp.sum(e, axis=1, keepdims=True)                 # [TB, 1, 1]
    attn = e * pl.reciprocal(denom, approx=False)             # [TB, N, 1] f32

    # mask = (x.sum(-1) != 0) — native-dtype row sum, no f32 copy of x.
    # Applied AFTER softmax without renormalization, exactly like the module.
    mask = jnp.sum(x, axis=-1, keepdims=True) != 0            # [TB, N, 1] bool
    attn = jnp.where(mask, attn, 0.0)

    # Weighted sum over nodes: multiply in x dtype, accumulate in f32.
    out = jnp.sum(x * attn.astype(x.dtype), axis=1, dtype=jnp.float32)   # [TB, D]
    out_ref[...] = out.astype(out_ref.dtype)


def _cores_per_chip():
    """Best-effort TensorCore count per device (v5e/v6e: 1, v7x/megacore: 2)."""
    try:
        kind = jax.devices()[0].device_kind.lower()
    except Exception:
        return 2
    if "lite" in kind or "v5e" in kind or "v6e" in kind:
        return 1
    return 2


def _choose_tile_b(B, N, D, x_itemsize, c_itemsize, Hp, cores,
                   vmem_budget=20 << 20):
    """Batch-tile size from a realistic per-step VMEM budget."""
    rup = lambda v, m: -(-v // m) * m
    # Sublane pack for the x dtype: 8 rows at 32-bit, 16 at 16-bit, 32 at 8-bit.
    sub_x = 8 * max(1, 4 // max(1, x_itemsize))
    Dp = rup(D, 128)                       # lane padding of the feature axis
    # Conservative per-batch-element residents at one grid step:
    #   * 3 lane/sublane-padded x tiles (2 double-buffered inputs + x*attn temp)
    #   * hidden activation h: f32 straight out of the MXU + compute-dtype copy
    per_b = 3 * rup(N, sub_x) * Dp * x_itemsize + N * Hp * (4 + c_itemsize)
    tb = max(8, (vmem_budget // max(per_b, 1)) // 8 * 8)
    b8 = rup(B, 8)
    if cores >= 2:
        # >= 2 grid steps per TensorCore so each core's double buffer pipelines.
        tb = min(tb, max(8, (b8 // (2 * cores)) // 8 * 8))
    tb = min(tb, b8)
    # Prefer a tile that divides B exactly (avoids a padded HBM copy of x),
    # but never shrink below tb/4 for it.
    if B % 8 == 0:
        t = tb
        floor = max(8, (tb // 4) // 8 * 8)
        while t >= floor:
            if B % t == 0:
                return t
            t -= 8
    return tb


def attention_readout(x_dense, w1, b1, w2, b2=None, *, tile_b=None,
                      compute_dtype=None):
    """x_dense: [B, N, D]; w1: [D, H]; b1: [H]; w2: [H] (Linear(H,1) weight);
    b2: scalar (ignored: softmax over nodes is shift-invariant). Returns [B, D]."""
    del b2  # mathematically a no-op under the node-axis softmax
    B, N, D = x_dense.shape
    H = w1.shape[1]
    Hp = ((H + 127) // 128) * 128          # lane-dense hidden width

    xdt = jnp.dtype(x_dense.dtype)
    if compute_dtype is None:
        # bf16 epilogue by default only when the input is already bf16
        # (always safe); pass jnp.bfloat16 explicitly on v6e/v7x for f32 inputs.
        compute_dtype = jnp.bfloat16 if xdt == jnp.bfloat16 else jnp.float32
    cdt = jnp.dtype(compute_dtype)

    # Zero-pad the hidden dimension; padded columns contribute exactly zero
    # through swish and the H->1 matmul.
    w1p = jnp.zeros((D, Hp), xdt).at[:, :H].set(w1.astype(xdt))
    b1p = jnp.zeros((1, Hp), cdt).at[0, :H].set(b1.astype(cdt))
    w2p = jnp.zeros((Hp, 1), cdt).at[:H, 0].set(w2.reshape(-1).astype(cdt))

    cores = _cores_per_chip()
    TB = tile_b if tile_b is not None else _choose_tile_b(
        B, N, D, xdt.itemsize, cdt.itemsize, Hp, cores)
    assert TB % 8 == 0 or TB == B, (B, TB)

    # Pad the batch axis (with zero rows) only when TB does not divide B.
    Bp = -(-B // TB) * TB
    xp = x_dense
    if Bp != B:
        xp = jnp.zeros((Bp, N, D), xdt).at[:B].set(x_dense)

    grid = (Bp // TB,)
    out = pl.pallas_call(
        _attention_readout_kernel,
        out_shape=jax.ShapeDtypeStruct((Bp, D), xdt),
        grid_spec=pltpu.PrefetchScalarGridSpec(
            num_scalar_prefetch=0,
            grid=grid,
            in_specs=[
                pl.BlockSpec((TB, N, D), lambda b: (b, 0, 0)),
                pl.BlockSpec((D, Hp), lambda b: (0, 0)),
                pl.BlockSpec((1, Hp), lambda b: (0, 0)),
                pl.BlockSpec((Hp, 1), lambda b: (0, 0)),
            ],
            out_specs=pl.BlockSpec((TB, D), lambda b: (b, 0)),
        ),
        compiler_params=pltpu.CompilerParams(
            dimension_semantics=("parallel",),
            vmem_limit_bytes=32 * 1024 * 1024,   # safe on v5e/v6e and v7x (64 MiB phys)
        ),
    )(xp, w1p, b1p, w2p)
    return out[:B] if Bp != B else out


def _reference(x_dense, w1, b1, w2, b2):
    # Pure-JAX reference mirroring the PyTorch forward (mask=None path).
    h = x_dense @ w1 + b1
    h = h * jax.nn.sigmoid(h)
    scores = h @ w2.reshape(-1, 1) + b2                      # [B, N, 1]
    attn = jax.nn.softmax(scores, axis=1)
    mask = (x_dense.sum(axis=-1) != 0).astype(x_dense.dtype)[..., None]
    attn = attn * mask
    return (x_dense * attn).sum(axis=1)


if __name__ == "__main__":
    B, N, D, H = 2, 8, 32, 32   # node_dim=32, readout_hidden_dim=32
    key = jax.random.PRNGKey(0)
    kx, kw1, kb1, kw2, kb2 = jax.random.split(key, 5)

    x = jax.random.normal(kx, (B, N, D), dtype=jnp.float32)
    # Zero out a couple of node rows so the mask path is exercised.
    x = x.at[0, 6:].set(0.0)
    x = x.at[1, 5:].set(0.0)

    # Deterministic parameter init (uniform(-1/sqrt(fan_in), 1/sqrt(fan_in)),
    # matching PyTorch Linear's default scale).
    s1 = float(D) ** -0.5
    s2 = float(H) ** -0.5
    w1 = jax.random.uniform(kw1, (D, H), minval=-s1, maxval=s1, dtype=jnp.float32)
    b1 = jax.random.uniform(kb1, (H,), minval=-s1, maxval=s1, dtype=jnp.float32)
    w2 = jax.random.uniform(kw2, (H,), minval=-s2, maxval=s2, dtype=jnp.float32)
    b2 = jax.random.uniform(kb2, (), minval=-s2, maxval=s2, dtype=jnp.float32)

    out = attention_readout(x, w1, b1, w2, b2)
    out = jax.block_until_ready(out)

    ref = _reference(x, w1, b1, w2, b2)
    assert out.shape == (B, D)
    assert jnp.allclose(out, ref, atol=1e-5, rtol=1e-5), (out, ref)
    print("KERNEL_OK")
</pallas_src>

<mosaic_0001>
module attributes {stable_mosaic.version = 11 : i64} {
  func.func @_attention_readout_kernel(%arg0: i32, %arg1: memref<8x8x32xf32, #tpu.memory_space<vmem>>, %arg2: memref<32x128xf32, #tpu.memory_space<vmem>>, %arg3: memref<1x128xf32, #tpu.memory_space<vmem>>, %arg4: memref<128x1xf32, #tpu.memory_space<vmem>>, %arg5: memref<8x32xf32, #tpu.memory_space<vmem>>) attributes {dimension_semantics = [#tpu.dimension_semantics<parallel>], iteration_bounds = array<i64: 1>, scalar_prefetch = 0 : i64, scratch_operands = 0 : i64, tpu.core_type = #tpu.core_type<tc>, window_params = [{transform_indices = @transform_0, window_bounds = array<i64: 8, 8, 32>}, {pipeline_mode = #tpu.pipeline_mode<synchronous>, transform_indices = @transform_1, window_bounds = array<i64: 32, 128>}, {pipeline_mode = #tpu.pipeline_mode<synchronous>, transform_indices = @transform_2, window_bounds = array<i64: 1, 128>}, {pipeline_mode = #tpu.pipeline_mode<synchronous>, transform_indices = @transform_3, window_bounds = array<i64: 128, 1>}, {transform_indices = @transform_4, window_bounds = array<i64: 8, 32>}]} {
    %c0 = arith.constant 0 : index
    %c0_0 = arith.constant 0 : index
    %c0_1 = arith.constant 0 : index
    %0 = vector.load %arg1[%c0, %c0_0, %c0_1] : memref<8x8x32xf32, #tpu.memory_space<vmem>>, vector<8x8x32xf32>
    %1 = vector.shape_cast %0 : vector<8x8x32xf32> to vector<64x32xf32>
    %c0_2 = arith.constant 0 : index
    %c0_3 = arith.constant 0 : index
    %2 = vector.load %arg2[%c0_2, %c0_3] : memref<32x128xf32, #tpu.memory_space<vmem>>, vector<32x128xf32>
    %cst = arith.constant dense<0.000000e+00> : vector<64x128xf32>
    %3 = tpu.matmul %1, %2, %cst {dimension_numbers = #tpu.dot_dimension_numbers<[1], [0], [0], [1], [0, 0, 1, 1], [], []>} : vector<64x32xf32>, vector<32x128xf32>, vector<64x128xf32> -> vector<64x128xf32>
    %c0_4 = arith.constant 0 : index
    %c0_5 = arith.constant 0 : index
    %4 = vector.load %arg3[%c0_4, %c0_5] : memref<1x128xf32, #tpu.memory_space<vmem>>, vector<1x128xf32>
    %5 = vector.broadcast %4 : vector<1x128xf32> to vector<64x128xf32>
    %6 = arith.addf %3, %5 : vector<64x128xf32>
    %7 = arith.negf %6 : vector<64x128xf32>
    %8 = math.exp %7 : vector<64x128xf32>
    %cst_6 = arith.constant 1.000000e+00 : f32
    %9 = vector.broadcast %cst_6 : f32 to vector<64x128xf32>
    %10 = arith.addf %9, %8 : vector<64x128xf32>
    %11 = arith.divf %9, %10 : vector<64x128xf32>
    %12 = arith.mulf %6, %11 : vector<64x128xf32>
    %c0_7 = arith.constant 0 : index
    %c0_8 = arith.constant 0 : index
    %13 = vector.load %arg4[%c0_7, %c0_8] : memref<128x1xf32, #tpu.memory_space<vmem>>, vector<128x1xf32>
    %cst_9 = arith.constant dense<0.000000e+00> : vector<64x1xf32>
    %14 = tpu.matmul %12, %13, %cst_9 {dimension_numbers = #tpu.dot_dimension_numbers<[1], [0], [0], [1], [0, 0, 1, 1], [], []>} : vector<64x128xf32>, vector<128x1xf32>, vector<64x1xf32> -> vector<64x1xf32>
    %15 = vector.shape_cast %14 : vector<64x1xf32> to vector<8x8x1xf32>
    %cst_10 = arith.constant dense<0xFF800000> : vector<8x1xf32>
    %16 = vector.multi_reduction <maximumf>, %15, %cst_10 [1] : vector<8x8x1xf32> to vector<8x1xf32>
    %17 = vector.shape_cast %16 : vector<8x1xf32> to vector<8x1x1xf32>
    %18 = vector.broadcast %17 : vector<8x1x1xf32> to vector<8x8x1xf32>
    %19 = arith.subf %15, %18 : vector<8x8x1xf32>
    %20 = math.exp %19 : vector<8x8x1xf32>
    %cst_11 = arith.constant dense<0.000000e+00> : vector<8x1xf32>
    %21 = vector.multi_reduction <add>, %20, %cst_11 [1] : vector<8x8x1xf32> to vector<8x1xf32>
    %22 = vector.shape_cast %21 : vector<8x1xf32> to vector<8x1x1xf32>
    %23 = tpu.reciprocal %22 : vector<8x1x1xf32> -> vector<8x1x1xf32>
    %24 = vector.broadcast %23 : vector<8x1x1xf32> to vector<8x8x1xf32>
    %25 = arith.mulf %20, %24 : vector<8x8x1xf32>
    %cst_12 = arith.constant dense<0.000000e+00> : vector<8x8xf32>
    %26 = vector.multi_reduction <add>, %0, %cst_12 [2] : vector<8x8x32xf32> to vector<8x8xf32>
    %27 = vector.shape_cast %26 : vector<8x8xf32> to vector<8x8x1xf32>
    %cst_13 = arith.constant 0.000000e+00 : f32
    %28 = vector.broadcast %cst_13 : f32 to vector<8x8x1xf32>
    %29 = arith.cmpf one, %27, %28 : vector<8x8x1xf32>
    %cst_14 = arith.constant 0.000000e+00 : f32
    %30 = vector.broadcast %cst_14 : f32 to vector<8x8x1xf32>
    %31 = arith.select %29, %25, %30 : vector<8x8x1xi1>, vector<8x8x1xf32>
    %32 = vector.broadcast %31 : vector<8x8x1xf32> to vector<8x8x32xf32>
    %33 = arith.mulf %0, %32 : vector<8x8x32xf32>
    %cst_15 = arith.constant dense<0.000000e+00> : vector<8x32xf32>
    %34 = vector.multi_reduction <add>, %33, %cst_15 [1] : vector<8x8x32xf32> to vector<8x32xf32>
    %c0_16 = arith.constant 0 : index
    %c0_17 = arith.constant 0 : index
    %35 = vector.load %arg5[%c0_16, %c0_17] : memref<8x32xf32, #tpu.memory_space<vmem>>, vector<8x32xf32>
    tpu.vector_store %arg5[%c0_16, %c0_17], %34 {strides = array<i32>} : memref<8x32xf32, #tpu.memory_space<vmem>>, vector<8x32xf32>,
    return
  }
  func.func @transform_0(%arg0: i32) -> (i32, i32, i32) {
    %c0_i32 = arith.constant 0 : i32
    %c0_i32_0 = arith.constant 0 : i32
    %c0_i32_1 = arith.constant 0 : i32
    return %arg0, %c0_i32, %c0_i32_0 : i32, i32, i32
  }
  func.func @transform_1(%arg0: i32) -> (i32, i32) {
    %c0_i32 = arith.constant 0 : i32
    %c0_i32_0 = arith.constant 0 : i32
    %c0_i32_1 = arith.constant 0 : i32
    return %c0_i32, %c0_i32_0 : i32, i32
  }
  func.func @transform_2(%arg0: i32) -> (i32, i32) {
    %c0_i32 = arith.constant 0 : i32
    %c0_i32_0 = arith.constant 0 : i32
    %c0_i32_1 = arith.constant 0 : i32
    return %c0_i32, %c0_i32_0 : i32, i32
  }
  func.func @transform_3(%arg0: i32) -> (i32, i32) {
    %c0_i32 = arith.constant 0 : i32
    %c0_i32_0 = arith.constant 0 : i32
    %c0_i32_1 = arith.constant 0 : i32
    return %c0_i32, %c0_i32_0 : i32, i32
  }
  func.func @transform_4(%arg0: i32) -> (i32, i32) {
    %c0_i32 = arith.constant 0 : i32
    %c0_i32_0 = arith.constant 0 : i32
    return %arg0, %c0_i32 : i32, i32
  }
}

</mosaic_0001>

<llo_original>
// kernel: tpu_custom_call.1
$region0: #{tpu_custom_call.1}
  #allocation0 [shape = 'u32[]', space=smem, size = 0x4, offset = 0x4, fixed_abs, tag = 'smem constant byte address 0x4 - core index']
  #allocation1 [shape = 'u32[144,128]{1,0:T(1,128)}', space=vmem, size = 0x12000, scoped, tag = 'internal scratch']
  %s0 = inlined_call_operand.vmem [shape: f32[8,8,32], index: 0, kind: input, shape index: {}]
  %s1 = inlined_call_operand.vmem [shape: f32[32,128], index: 1, kind: input, shape index: {}]
  %s2 = inlined_call_operand.vmem [shape: f32[1,128], index: 2, kind: input, shape index: {}]
  %s3 = inlined_call_operand.vmem [shape: f32[128,1], index: 3, kind: input, shape index: {}]
  %s4 = inlined_call_operand.hbm [shape: f32[8,32], index: 4, kind: output, shape index: {}]
  %s5 = sld [smem:[#allocation0]]
  $region26: #{tpu_custom_call.1} parent=0
    _
  %s7 = ssub.s32 1, %s5
  %s8 = scalar_select 0, %s7, %s5
  $region1: #{tpu_custom_call.1} parent=0
    #allocation2 [shape = 'u8[4096]{0}', space=vmem, size = 0x1000, scoped, tag = 'output window, operand 0, single buffered']
    #allocation3 [shape = 's32[1]{0}', space=sflag, size = 0x4, scoped, tag = 'scoped memory for tpu_custom_call.1']
    %9 = vsyncpa [#allocation3], 0
    // Predicated region
    $region2: #{tpu_custom_call.1} parent=1 // pred_check
      _
    $region3: #{tpu_custom_call.1} parent=1 // pred_check_branch
      %11 = sbr.rel (0) target = $region5
    $region4: #{tpu_custom_call.1} parent=1 // pred_region
      _
    $region5: #{tpu_custom_call.1} parent=1 // pred_fallthru
      _
    // Predicated region
    $region6: #{tpu_custom_call.1} parent=1 // pred_check
      _
    $region7: #{tpu_custom_call.1} parent=1 // pred_check_branch
      %13 = sbr.rel (0) target = $region9
    $region8: #{tpu_custom_call.1} parent=1 // pred_region
      _
    $region9: #{tpu_custom_call.1} parent=1 // pred_fallthru
      _
    // Predicated region
    $region10: #{tpu_custom_call.1} parent=1 // pred_check
      _
    $region11: #{tpu_custom_call.1} parent=1 // pred_check_branch
      %15 = sbr.rel (0) target = $region13
    $region12: #{tpu_custom_call.1} parent=1 // pred_region
      _
    $region13: #{tpu_custom_call.1} parent=1 // pred_fallthru
      _
    // Predicated region
    $region14: #{tpu_custom_call.1} parent=1 // pred_check
      _
    $region15: #{tpu_custom_call.1} parent=1 // pred_check_branch
      %17 = sbr.rel (0) target = $region17
    $region16: #{tpu_custom_call.1} parent=1 // pred_region
      _
    $region17: #{tpu_custom_call.1} parent=1 // pred_fallthru
      _
    %v18 = vld [vmem:[%s0] sm:$0xff]
    %v19 = vld [vmem:[%s0 + $0x8] sm:$0xff]
    %v20 = vld [vmem:[%s0 + $0x10] sm:$0xff]
    %v21 = vld [vmem:[%s0 + $0x18] sm:$0xff]
    %v22 = vld [vmem:[%s0 + $0x20] sm:$0xff]
    %v23 = vld [vmem:[%s0 + $0x28] sm:$0xff]
    %v24 = vld [vmem:[%s0 + $0x30] sm:$0xff]
    %v25 = vld [vmem:[%s0 + $0x38] sm:$0xff]
    %v26 = vld [vmem:[%s1] sm:$0xff]
    %v27 = vld [vmem:[%s1 + $0x8] sm:$0xff]
    %v28 = vld [vmem:[%s1 + $0x10] sm:$0xff]
    %v29 = vld [vmem:[%s1 + $0x18] sm:$0xff]
    %v30 = vld [vmem:[%s2] sm:$0x1]
    %v32 = vlaneseq
    %v33 = vshrl.u32 %v32, 7
    %v34 = vsub.s32 0, %v33
    %v35 = vrot.slane %v30, %v34
    %vm37 = vcmask 261120
    %v39 = vsel %vm37, %v18, 0
    %v42 = vsel %vm37, %v19, 0
    %v45 = vsel %vm37, %v20, 0
    %v48 = vsel %vm37, %v21, 0
    %v51 = vsel %vm37, %v22, 0
    %v54 = vsel %vm37, %v23, 0
    %v57 = vsel %vm37, %v24, 0
    %v60 = vsel %vm37, %v25, 0
    %62 = vmatprep.subr.mxu0 0.0
    %63 = vmatpush1.msra.mxu0 0.0
    %64 = vmatprep.subr.mxu0 0.0
    %65 = vmatpush1.msra.mxu0 0.0
    %66 = vmatprep.subr.mxu0 0.0
    %67 = vmatpush1.msra.mxu0 0.0
    %68 = vmatprep.subr.mxu0 0.0
    %69 = vmatpush1.msra.mxu0 0.0
    %70 = vmatprep.subr.mxu0 0.0
    %71 = vmatpush1.msra.mxu0 0.0
    %72 = vmatprep.subr.mxu0 0.0
    %73 = vmatpush1.msra.mxu0 0.0
    %74 = vmatprep.subr.mxu0 0.0
    %75 = vmatpush1.msra.mxu0 0.0
    %76 = vmatprep.subr.mxu0 0.0
    %77 = vmatpush1.msra.mxu0 0.0
    %78 = vmatprep.subr.mxu0 0.0
    %79 = vmatpush1.msra.mxu0 0.0
    %80 = vmatprep.subr.mxu0 0.0
    %81 = vmatpush1.msra.mxu0 0.0
    %82 = vmatprep.subr.mxu0 0.0
    %83 = vmatpush1.msra.mxu0 0.0
    %84 = vmatprep.subr.mxu0 0.0
    %85 = vmatpush1.msra.mxu0 0.0
    %86 = vmatprep.subr.mxu0 0.0
    %87 = vmatpush1.msra.mxu0 %v29
    %88 = vmatprep.subr.mxu0 0.0
    %89 = vmatpush1.msra.mxu0 %v28
    %90 = vmatprep.subr.mxu0 0.0
    %91 = vmatpush1.msra.mxu0 %v27
    %92 = vmatprep.subr.mxu0 0.0
    %93 = vmatpush1.msra.mxu0 %v26
    %94 = vmatprep.subr.mxu0 0.0
    %95 = vmatpush2.msra.mxu0 0.0
    %96 = vmatprep.subr.mxu0 0.0
    %97 = vmatpush2.msra.mxu0 0.0
    %98 = vmatprep.subr.mxu0 0.0
    %99 = vmatpush2.msra.mxu0 0.0
    %100 = vmatprep.subr.mxu0 0.0
    %101 = vmatpush2.msra.mxu0 0.0
    %102 = vmatprep.subr.mxu0 0.0
    %103 = vmatpush2.msra.mxu0 0.0
    %104 = vmatprep.subr.mxu0 0.0
    %105 = vmatpush2.msra.mxu0 0.0
    %106 = vmatprep.subr.mxu0 0.0
    %107 = vmatpush2.msra.mxu0 0.0
    %108 = vmatprep.subr.mxu0 0.0
    %109 = vmatpush2.msra.mxu0 0.0
    %110 = vmatprep.subr.mxu0 0.0
    %111 = vmatpush2.msra.mxu0 0.0
    %112 = vmatprep.subr.mxu0 0.0
    %113 = vmatpush2.msra.mxu0 0.0
    %114 = vmatprep.subr.mxu0 0.0
    %115 = vmatpush2.msra.mxu0 0.0
    %116 = vmatprep.subr.mxu0 0.0
    %117 = vmatpush2.msra.mxu0 0.0
    %118 = vmatprep.subr.mxu0 0.0
    %119 = vmatpush2.msra.mxu0 0.0
    %120 = vmatprep.subr.mxu0 0.0
    %121 = vmatpush2.msra.mxu0 0.0
    %122 = vmatprep.subr.mxu0 0.0
    %123 = vmatpush2.msra.mxu0 0.0
    %124 = vmatprep.subr.mxu0 0.0
    %125 = vmatpush2.msra.mxu0 0.0
    %126 = vmatprep.mubr.f32.mxu0 0.0
    %127 = vmatmul.mubr.f32.gmra.mxu0 %v39
    %v128 = vpop.f32.mrf.mxu0
    %v129 = vadd.f32 %v35, %v128
    %v130 = vpop.f32.mrf.mxu0
    %131 = vmatprep.mubr.f32.mxu0 0.0
    %132 = vmatmul.mubr.f32.gmra.mxu0 %v42
    %v133 = vpop.f32.mrf.mxu0
    %v134 = vadd.f32 %v35, %v133
    %v135 = vpop.f32.mrf.mxu0
    %136 = vmatprep.mubr.f32.mxu0 0.0
    %137 = vmatmul.mubr.f32.gmra.mxu0 %v45
    %v138 = vpop.f32.mrf.mxu0
    %v139 = vadd.f32 %v35, %v138
    %v140 = vpop.f32.mrf.mxu0
    %141 = vmatprep.mubr.f32.mxu0 0.0
    %142 = vmatmul.mubr.f32.gmra.mxu0 %v48
    %v143 = vpop.f32.mrf.mxu0
    %v144 = vadd.f32 %v35, %v143
    %v145 = vpop.f32.mrf.mxu0
    %146 = vmatprep.mubr.f32.mxu0 0.0
    %147 = vmatmul.mubr.f32.gmra.mxu0 %v51
    %v148 = vpop.f32.mrf.mxu0
    %v149 = vadd.f32 %v35, %v148
    %v150 = vpop.f32.mrf.mxu0
    %151 = vmatprep.mubr.f32.mxu0 0.0
    %152 = vmatmul.mubr.f32.gmra.mxu0 %v54
    %v153 = vpop.f32.mrf.mxu0
    %v154 = vadd.f32 %v35, %v153
    %v155 = vpop.f32.mrf.mxu0
    %156 = vmatprep.mubr.f32.mxu0 0.0
    %157 = vmatmul.mubr.f32.gmra.mxu0 %v57
    %v158 = vpop.f32.mrf.mxu0
    %v159 = vadd.f32 %v35, %v158
    %v160 = vpop.f32.mrf.mxu0
    %161 = vmatprep.mubr.f32.mxu0 0.0
    %162 = vmatmul.mubr.f32.gmra.mxu0 %v60
    %v163 = vpop.f32.mrf.mxu0
    %v164 = vadd.f32 %v35, %v163
    %v165 = vpop.f32.mrf.mxu0
    %166 = vdwg.mxu0
    %v167 = vxor.u32 %v129, 2147483648
    %v168 = vxor.u32 %v134, 2147483648
    %v169 = vxor.u32 %v139, 2147483648
    %v170 = vxor.u32 %v144, 2147483648
    %v171 = vxor.u32 %v149, 2147483648
    %v172 = vxor.u32 %v154, 2147483648
    %v173 = vxor.u32 %v159, 2147483648
    %v174 = vxor.u32 %v164, 2147483648
    %v175 = vmul.f32 %v167, 1.442695
    %v176 = vpow.pop %v175
    %v177 = vmul.f32 %v168, 1.442695
    %v178 = vpow.pop %v177
    %v179 = vmul.f32 %v169, 1.442695
    %v180 = vpow.pop %v179
    %v181 = vmul.f32 %v170, 1.442695
    %v182 = vpow.pop %v181
    %v183 = vmul.f32 %v171, 1.442695
    %v184 = vpow.pop %v183
    %v185 = vmul.f32 %v172, 1.442695
    %v186 = vpow.pop %v185
    %v187 = vmul.f32 %v173, 1.442695
    %v188 = vpow.pop %v187
    %v189 = vmul.f32 %v174, 1.442695
    %v190 = vpow.pop %v189
    %v191 = vadd.f32 %v176, 1.0
    %v192 = vadd.f32 %v178, 1.0
    %v193 = vadd.f32 %v180, 1.0
    %v194 = vadd.f32 %v182, 1.0
    %v195 = vadd.f32 %v184, 1.0
    %v196 = vadd.f32 %v186, 1.0
    %v197 = vadd.f32 %v188, 1.0
    %v198 = vadd.f32 %v190, 1.0
    %v199 = vrcp.pop %v191
    %v200 = vmul.f32 1.0, %v199
    %v201 = vrcp.pop %v192
    %v202 = vmul.f32 1.0, %v201
    %v203 = vrcp.pop %v193
    %v204 = vmul.f32 1.0, %v203
    %v205 = vrcp.pop %v194
    %v206 = vmul.f32 1.0, %v205
    %v207 = vrcp.pop %v195
    %v208 = vmul.f32 1.0, %v207
    %v209 = vrcp.pop %v196
    %v210 = vmul.f32 1.0, %v209
    %v211 = vrcp.pop %v197
    %v212 = vmul.f32 1.0, %v211
    %v213 = vrcp.pop %v198
    %v214 = vmul.f32 1.0, %v213
    %v215 = vmul.f32 %v129, %v200
    %v216 = vmul.f32 %v134, %v202
    %v217 = vmul.f32 %v139, %v204
    %v218 = vmul.f32 %v144, %v206
    %v219 = vmul.f32 %v149, %v208
    %v220 = vmul.f32 %v154, %v210
    %v221 = vmul.f32 %v159, %v212
    %v222 = vmul.f32 %v164, %v214
    %v223 = vld [vmem:[%s3] sm:$0xff]
    %v224 = vld [vmem:[%s3 + $0x8] sm:$0xff]
    %v225 = vld [vmem:[%s3 + $0x10] sm:$0xff]
    %v226 = vld [vmem:[%s3 + $0x18] sm:$0xff]
    %v227 = vld [vmem:[%s3 + $0x20] sm:$0xff]
    %v228 = vld [vmem:[%s3 + $0x28] sm:$0xff]
    %v229 = vld [vmem:[%s3 + $0x30] sm:$0xff]
    %v230 = vld [vmem:[%s3 + $0x38] sm:$0xff]
    %v231 = vld [vmem:[%s3 + $0x40] sm:$0xff]
    %v232 = vld [vmem:[%s3 + $0x48] sm:$0xff]
    %v233 = vld [vmem:[%s3 + $0x50] sm:$0xff]
    %v234 = vld [vmem:[%s3 + $0x58] sm:$0xff]
    %v235 = vld [vmem:[%s3 + $0x60] sm:$0xff]
    %v236 = vld [vmem:[%s3 + $0x68] sm:$0xff]
    %v237 = vld [vmem:[%s3 + $0x70] sm:$0xff]
    %v238 = vld [vmem:[%s3 + $0x78] sm:$0xff]
    %239 = vmatprep.subr.mxu0 0.0
    %240 = vmatpush1.msra.mxu0 %v238
    %241 = vmatprep.subr.mxu0 0.0
    %242 = vmatpush1.msra.mxu0 %v237
    %243 = vmatprep.subr.mxu0 0.0
    %244 = vmatpush1.msra.mxu0 %v236
    %245 = vmatprep.subr.mxu0 0.0
    %246 = vmatpush1.msra.mxu0 %v235
    %247 = vmatprep.subr.mxu0 0.0
    %248 = vmatpush1.msra.mxu0 %v234
    %249 = vmatprep.subr.mxu0 0.0
    %250 = vmatpush1.msra.mxu0 %v233
    %251 = vmatprep.subr.mxu0 0.0
    %252 = vmatpush1.msra.mxu0 %v232
    %253 = vmatprep.subr.mxu0 0.0
    %254 = vmatpush1.msra.mxu0 %v231
    %255 = vmatprep.subr.mxu0 0.0
    %256 = vmatpush1.msra.mxu0 %v230
    %257 = vmatprep.subr.mxu0 0.0
    %258 = vmatpush1.msra.mxu0 %v229
    %259 = vmatprep.subr.mxu0 0.0
    %260 = vmatpush1.msra.mxu0 %v228
    %261 = vmatprep.subr.mxu0 0.0
    %262 = vmatpush1.msra.mxu0 %v227
    %263 = vmatprep.subr.mxu0 0.0
    %264 = vmatpush1.msra.mxu0 %v226
    %265 = vmatprep.subr.mxu0 0.0
    %266 = vmatpush1.msra.mxu0 %v225
    %267 = vmatprep.subr.mxu0 0.0
    %268 = vmatpush1.msra.mxu0 %v224
    %269 = vmatprep.subr.mxu0 0.0
    %270 = vmatpush1.msra.mxu0 %v223
    %271 = vmatprep.subr.mxu0 0.0
    %272 = vmatpush2.msra.mxu0 0.0
    %273 = vmatprep.subr.mxu0 0.0
    %274 = vmatpush2.msra.mxu0 0.0
    %275 = vmatprep.subr.mxu0 0.0
    %276 = vmatpush2.msra.mxu0 0.0
    %277 = vmatprep.subr.mxu0 0.0
    %278 = vmatpush2.msra.mxu0 0.0
    %279 = vmatprep.subr.mxu0 0.0
    %280 = vmatpush2.msra.mxu0 0.0
    %281 = vmatprep.subr.mxu0 0.0
    %282 = vmatpush2.msra.mxu0 0.0
    %283 = vmatprep.subr.mxu0 0.0
    %284 = vmatpush2.msra.mxu0 0.0
    %285 = vmatprep.subr.mxu0 0.0
    %286 = vmatpush2.msra.mxu0 0.0
    %287 = vmatprep.subr.mxu0 0.0
    %288 = vmatpush2.msra.mxu0 0.0
    %289 = vmatprep.subr.mxu0 0.0
    %290 = vmatpush2.msra.mxu0 0.0
    %291 = vmatprep.subr.mxu0 0.0
    %292 = vmatpush2.msra.mxu0 0.0
    %293 = vmatprep.subr.mxu0 0.0
    %294 = vmatpush2.msra.mxu0 0.0
    %295 = vmatprep.subr.mxu0 0.0
    %296 = vmatpush2.msra.mxu0 0.0
    %297 = vmatprep.subr.mxu0 0.0
    %298 = vmatpush2.msra.mxu0 0.0
    %299 = vmatprep.subr.mxu0 0.0
    %300 = vmatpush2.msra.mxu0 0.0
    %301 = vmatprep.subr.mxu0 0.0
    %302 = vmatpush2.msra.mxu0 0.0
    %303 = vmatprep.mubr.f32.mxu0 0.0
    %304 = vmatmul.mubr.f32.gmra.mxu0 %v215
    %v305 = vpop.f32.mrf.mxu0
    %v306 = vadd.f32 0.0, %v305
    %v307 = vpop.f32.mrf.mxu0
    %308 = vmatprep.mubr.f32.mxu0 0.0
    %309 = vmatmul.mubr.f32.gmra.mxu0 %v216
    %v310 = vpop.f32.mrf.mxu0
    %v311 = vadd.f32 0.0, %v310
    %v312 = vpop.f32.mrf.mxu0
    %313 = vmatprep.mubr.f32.mxu0 0.0
    %314 = vmatmul.mubr.f32.gmra.mxu0 %v217
    %v315 = vpop.f32.mrf.mxu0
    %v316 = vadd.f32 0.0, %v315
    %v317 = vpop.f32.mrf.mxu0
    %318 = vmatprep.mubr.f32.mxu0 0.0
    %319 = vmatmul.mubr.f32.gmra.mxu0 %v218
    %v320 = vpop.f32.mrf.mxu0
    %v321 = vadd.f32 0.0, %v320
    %v322 = vpop.f32.mrf.mxu0
    %323 = vmatprep.mubr.f32.mxu0 0.0
    %324 = vmatmul.mubr.f32.gmra.mxu0 %v219
    %v325 = vpop.f32.mrf.mxu0
    %v326 = vadd.f32 0.0, %v325
    %v327 = vpop.f32.mrf.mxu0
    %328 = vmatprep.mubr.f32.mxu0 0.0
    %329 = vmatmul.mubr.f32.gmra.mxu0 %v220
    %v330 = vpop.f32.mrf.mxu0
    %v331 = vadd.f32 0.0, %v330
    %v332 = vpop.f32.mrf.mxu0
    %333 = vmatprep.mubr.f32.mxu0 0.0
    %334 = vmatmul.mubr.f32.gmra.mxu0 %v221
    %v335 = vpop.f32.mrf.mxu0
    %v336 = vadd.f32 0.0, %v335
    %v337 = vpop.f32.mrf.mxu0
    %338 = vmatprep.mubr.f32.mxu0 0.0
    %339 = vmatmul.mubr.f32.gmra.mxu0 %v222
    %v340 = vpop.f32.mrf.mxu0
    %v341 = vadd.f32 0.0, %v340
    %v342 = vpop.f32.mrf.mxu0
    %343 = vdwg.mxu0
    %vm344 = vcmask 7168
    %v345 = vsel %vm344, %v306, -inf
    %v346 = vrot.slane %v345, 4
    %v347 = vmax.f32 %v345, %v346
    %v348 = vrot.slane %v347, 2
    %v349 = vmax.f32 %v347, %v348
    %v350 = vrot.slane %v349, 1
    %v351 = vmax.f32 %v349, %v350
    %v352 = vsel %vm344, %v311, -inf
    %v353 = vrot.slane %v352, 4
    %v354 = vmax.f32 %v352, %v353
    %v355 = vrot.slane %v354, 2
    %v356 = vmax.f32 %v354, %v355
    %v357 = vrot.slane %v356, 1
    %v358 = vmax.f32 %v356, %v357
    %v359 = vsel %vm344, %v316, -inf
    %v360 = vrot.slane %v359, 4
    %v361 = vmax.f32 %v359, %v360
    %v362 = vrot.slane %v361, 2
    %v363 = vmax.f32 %v361, %v362
    %v364 = vrot.slane %v363, 1
    %v365 = vmax.f32 %v363, %v364
    %v366 = vsel %vm344, %v321, -inf
    %v367 = vrot.slane %v366, 4
    %v368 = vmax.f32 %v366, %v367
    %v369 = vrot.slane %v368, 2
    %v370 = vmax.f32 %v368, %v369
    %v371 = vrot.slane %v370, 1
    %v372 = vmax.f32 %v370, %v371
    %v373 = vsel %vm344, %v326, -inf
    %v374 = vrot.slane %v373, 4
    %v375 = vmax.f32 %v373, %v374
    %v376 = vrot.slane %v375, 2
    %v377 = vmax.f32 %v375, %v376
    %v378 = vrot.slane %v377, 1
    %v379 = vmax.f32 %v377, %v378
    %v380 = vsel %vm344, %v331, -inf
    %v381 = vrot.slane %v380, 4
    %v382 = vmax.f32 %v380, %v381
    %v383 = vrot.slane %v382, 2
    %v384 = vmax.f32 %v382, %v383
    %v385 = vrot.slane %v384, 1
    %v386 = vmax.f32 %v384, %v385
    %v387 = vsel %vm344, %v336, -inf
    %v388 = vrot.slane %v387, 4
    %v389 = vmax.f32 %v387, %v388
    %v390 = vrot.slane %v389, 2
    %v391 = vmax.f32 %v389, %v390
    %v392 = vrot.slane %v391, 1
    %v393 = vmax.f32 %v391, %v392
    %v394 = vsel %vm344, %v341, -inf
    %v395 = vrot.slane %v394, 4
    %v396 = vmax.f32 %v394, %v395
    %v397 = vrot.slane %v396, 2
    %v398 = vmax.f32 %v396, %v397
    %v399 = vrot.slane %v398, 1
    %v400 = vmax.f32 %v398, %v399
    %v401 = vsub.f32 %v306, %v351
    %v402 = vsub.f32 %v311, %v358
    %v403 = vsub.f32 %v316, %v365
    %v404 = vsub.f32 %v321, %v372
    %v405 = vsub.f32 %v326, %v379
    %v406 = vsub.f32 %v331, %v386
    %v407 = vsub.f32 %v336, %v393
    %v408 = vsub.f32 %v341, %v400
    %v409 = vmul.f32 %v401, 1.442695
    %v410 = vpow.pop %v409
    %v411 = vmul.f32 %v402, 1.442695
    %v412 = vpow.pop %v411
    %v413 = vmul.f32 %v403, 1.442695
    %v414 = vpow.pop %v413
    %v415 = vmul.f32 %v404, 1.442695
    %v416 = vpow.pop %v415
    %v417 = vmul.f32 %v405, 1.442695
    %v418 = vpow.pop %v417
    %v419 = vmul.f32 %v406, 1.442695
    %v420 = vpow.pop %v419
    %v421 = vmul.f32 %v407, 1.442695
    %v422 = vpow.pop %v421
    %v423 = vmul.f32 %v408, 1.442695
    %v424 = vpow.pop %v423
    %v425 = vsel %vm344, %v410, 0.0
    %v426 = vrot.slane %v425, 4
    %v427 = vadd.f32 %v425, %v426
    %v428 = vrot.slane %v427, 2
    %v429 = vadd.f32 %v427, %v428
    %v430 = vrot.slane %v429, 1
    %v431 = vadd.f32 %v429, %v430
    %v432 = vsel %vm344, %v412, 0.0
    %v433 = vrot.slane %v432, 4
    %v434 = vadd.f32 %v432, %v433
    %v435 = vrot.slane %v434, 2
    %v436 = vadd.f32 %v434, %v435
    %v437 = vrot.slane %v436, 1
    %v438 = vadd.f32 %v436, %v437
    %v439 = vsel %vm344, %v414, 0.0
    %v440 = vrot.slane %v439, 4
    %v441 = vadd.f32 %v439, %v440
    %v442 = vrot.slane %v441, 2
    %v443 = vadd.f32 %v441, %v442
    %v444 = vrot.slane %v443, 1
    %v445 = vadd.f32 %v443, %v444
    %v446 = vsel %vm344, %v416, 0.0
    %v447 = vrot.slane %v446, 4
    %v448 = vadd.f32 %v446, %v447
    %v449 = vrot.slane %v448, 2
    %v450 = vadd.f32 %v448, %v449
    %v451 = vrot.slane %v450, 1
    %v452 = vadd.f32 %v450, %v451
    %v453 = vsel %vm344, %v418, 0.0
    %v454 = vrot.slane %v453, 4
    %v455 = vadd.f32 %v453, %v454
    %v456 = vrot.slane %v455, 2
    %v457 = vadd.f32 %v455, %v456
    %v458 = vrot.slane %v457, 1
    %v459 = vadd.f32 %v457, %v458
    %v460 = vsel %vm344, %v420, 0.0
    %v461 = vrot.slane %v460, 4
    %v462 = vadd.f32 %v460, %v461
    %v463 = vrot.slane %v462, 2
    %v464 = vadd.f32 %v462, %v463
    %v465 = vrot.slane %v464, 1
    %v466 = vadd.f32 %v464, %v465
    %v467 = vsel %vm344, %v422, 0.0
    %v468 = vrot.slane %v467, 4
    %v469 = vadd.f32 %v467, %v468
    %v470 = vrot.slane %v469, 2
    %v471 = vadd.f32 %v469, %v470
    %v472 = vrot.slane %v471, 1
    %v473 = vadd.f32 %v471, %v472
    %v474 = vsel %vm344, %v424, 0.0
    %v475 = vrot.slane %v474, 4
    %v476 = vadd.f32 %v474, %v475
    %v477 = vrot.slane %v476, 2
    %v478 = vadd.f32 %v476, %v477
    %v479 = vrot.slane %v478, 1
    %v480 = vadd.f32 %v478, %v479
    %v481 = vrcp.pop %v431
    %v482 = vrcp.pop %v438
    %v483 = vrcp.pop %v445
    %v484 = vrcp.pop %v452
    %v485 = vrcp.pop %v459
    %v486 = vrcp.pop %v466
    %v487 = vrcp.pop %v473
    %v488 = vrcp.pop %v480
    %v489 = vmul.f32 %v410, %v481
    %v490 = vmul.f32 %v412, %v482
    %v491 = vmul.f32 %v414, %v483
    %v492 = vmul.f32 %v416, %v484
    %v493 = vmul.f32 %v418, %v485
    %v494 = vmul.f32 %v420, %v486
    %v495 = vmul.f32 %v422, %v487
    %v496 = vmul.f32 %v424, %v488
    %v497 = vsel %vm37, %v18, 0.0
    %498 = vadd.xlane.f32.xlu0 %v497
    %v499 = vpop.xlane.xlu0 %498
    %v500 = vsel %vm37, %v19, 0.0
    %501 = vadd.xlane.f32.xlu0 %v500
    %v502 = vpop.xlane.xlu0 %501
    %v503 = vsel %vm37, %v20, 0.0
    %504 = vadd.xlane.f32.xlu0 %v503
    %v505 = vpop.xlane.xlu0 %504
    %v506 = vsel %vm37, %v21, 0.0
    %507 = vadd.xlane.f32.xlu0 %v506
    %v508 = vpop.xlane.xlu0 %507
    %v509 = vsel %vm37, %v22, 0.0
    %510 = vadd.xlane.f32.xlu0 %v509
    %v511 = vpop.xlane.xlu0 %510
    %v512 = vsel %vm37, %v23, 0.0
    %513 = vadd.xlane.f32.xlu0 %v512
    %v514 = vpop.xlane.xlu0 %513
    %v515 = vsel %vm37, %v24, 0.0
    %516 = vadd.xlane.f32.xlu0 %v515
    %v517 = vpop.xlane.xlu0 %516
    %v518 = vsel %vm37, %v25, 0.0
    %519 = vadd.xlane.f32.xlu0 %v518
    %v520 = vpop.xlane.xlu0 %519
    %vm521 = vcmp.ne.f32.partialorder %v499, 0.0
    %vm522 = vcmp.ne.f32.partialorder %v502, 0.0
    %vm523 = vcmp.ne.f32.partialorder %v505, 0.0
    %vm524 = vcmp.ne.f32.partialorder %v508, 0.0
    %vm525 = vcmp.ne.f32.partialorder %v511, 0.0
    %vm526 = vcmp.ne.f32.partialorder %v514, 0.0
    %vm527 = vcmp.ne.f32.partialorder %v517, 0.0
    %vm528 = vcmp.ne.f32.partialorder %v520, 0.0
    %v529 = vsel %vm521, %v489, 0.0
    %v530 = vsel %vm522, %v490, 0.0
    %v531 = vsel %vm523, %v491, 0.0
    %v532 = vsel %vm524, %v492, 0.0
    %v533 = vsel %vm525, %v493, 0.0
    %v534 = vsel %vm526, %v494, 0.0
    %v535 = vsel %vm527, %v495, 0.0
    %v536 = vsel %vm528, %v496, 0.0
    %538 = vset.pattern.permute.xlu0 0
    %539 = vperm.xlu0 %538, %v529
    %v540 = vpop.permute.xlu0 %539
    %543 = vset.pattern.permute.xlu0 0
    %544 = vperm.xlu0 %543, %v530
    %v545 = vpop.permute.xlu0 %544
    %548 = vset.pattern.permute.xlu0 0
    %549 = vperm.xlu0 %548, %v531
    %v550 = vpop.permute.xlu0 %549
    %553 = vset.pattern.permute.xlu0 0
    %554 = vperm.xlu0 %553, %v532
    %v555 = vpop.permute.xlu0 %554
    %558 = vset.pattern.permute.xlu0 0
    %559 = vperm.xlu0 %558, %v533
    %v560 = vpop.permute.xlu0 %559
    %563 = vset.pattern.permute.xlu0 0
    %564 = vperm.xlu0 %563, %v534
    %v565 = vpop.permute.xlu0 %564
    %568 = vset.pattern.permute.xlu0 0
    %569 = vperm.xlu0 %568, %v535
    %v570 = vpop.permute.xlu0 %569
    %573 = vset.pattern.permute.xlu0 0
    %574 = vperm.xlu0 %573, %v536
    %v575 = vpop.permute.xlu0 %574
    %v577 = vmul.f32 %v18, %v540
    %v578 = vmul.f32 %v19, %v545
    %v579 = vmul.f32 %v20, %v550
    %v580 = vmul.f32 %v21, %v555
    %v581 = vmul.f32 %v22, %v560
    %v582 = vmul.f32 %v23, %v565
    %v583 = vmul.f32 %v24, %v570
    %v584 = vmul.f32 %v25, %v575
    %v585 = vsel %vm37, %v577, 0.0
    %v586 = vrot.slane %v585, 4
    %v587 = vadd.f32 %v585, %v586
    %v588 = vrot.slane %v587, 2
    %v589 = vadd.f32 %v587, %v588
    %v590 = vrot.slane %v589, 1
    %v591 = vadd.f32 %v589, %v590
    %v592 = vsel %vm37, %v578, 0.0
    %v593 = vrot.slane %v592, 4
    %v594 = vadd.f32 %v592, %v593
    %v595 = vrot.slane %v594, 2
    %v596 = vadd.f32 %v594, %v595
    %v597 = vrot.slane %v596, 1
    %v598 = vadd.f32 %v596, %v597
    %v599 = vsel %vm37, %v579, 0.0
    %v600 = vrot.slane %v599, 4
    %v601 = vadd.f32 %v599, %v600
    %v602 = vrot.slane %v601, 2
    %v603 = vadd.f32 %v601, %v602
    %v604 = vrot.slane %v603, 1
    %v605 = vadd.f32 %v603, %v604
    %v606 = vsel %vm37, %v580, 0.0
    %v607 = vrot.slane %v606, 4
    %v608 = vadd.f32 %v606, %v607
    %v609 = vrot.slane %v608, 2
    %v610 = vadd.f32 %v608, %v609
    %v611 = vrot.slane %v610, 1
    %v612 = vadd.f32 %v610, %v611
    %v613 = vsel %vm37, %v581, 0.0
    %v614 = vrot.slane %v613, 4
    %v615 = vadd.f32 %v613, %v614
    %v616 = vrot.slane %v615, 2
    %v617 = vadd.f32 %v615, %v616
    %v618 = vrot.slane %v617, 1
    %v619 = vadd.f32 %v617, %v618
    %v620 = vsel %vm37, %v582, 0.0
    %v621 = vrot.slane %v620, 4
    %v622 = vadd.f32 %v620, %v621
    %v623 = vrot.slane %v622, 2
    %v624 = vadd.f32 %v622, %v623
    %v625 = vrot.slane %v624, 1
    %v626 = vadd.f32 %v624, %v625
    %v627 = vsel %vm37, %v583, 0.0
    %v628 = vrot.slane %v627, 4
    %v629 = vadd.f32 %v627, %v628
    %v630 = vrot.slane %v629, 2
    %v631 = vadd.f32 %v629, %v630
    %v632 = vrot.slane %v631, 1
    %v633 = vadd.f32 %v631, %v632
    %v634 = vsel %vm37, %v584, 0.0
    %v635 = vrot.slane %v634, 4
    %v636 = vadd.f32 %v634, %v635
    %v637 = vrot.slane %v636, 2
    %v638 = vadd.f32 %v636, %v637
    %v639 = vrot.slane %v638, 1
    %v640 = vadd.f32 %v638, %v639
    %vm649 = vcmask 1041409
    %v650 = vsel %vm649, %v598, %v591
    %vm651 = vcmask 1042434
    %v652 = vsel %vm651, %v605, %v650
    %vm653 = vcmask 1043459
    %v654 = vsel %vm653, %v612, %v652
    %vm655 = vcmask 1044484
    %v656 = vsel %vm655, %v619, %v654
    %vm657 = vcmask 1045509
    %v658 = vsel %vm657, %v626, %v656
    %vm659 = vcmask 1046534
    %v660 = vsel %vm659, %v633, %v658
    %vm661 = vcmask 1047559
    %v662 = vsel %vm661, %v640, %v660
    %664 = vst.msk [vmem:[#allocation2] sm:$0xff] %vm37, %v662
    // Predicated region
    $region18: #{tpu_custom_call.1} parent=1 // pred_check
      _
    $region19: #{tpu_custom_call.1} parent=1 // pred_check_branch
      %666 = sbr.rel (0) target = $region21
    $region20: #{tpu_custom_call.1} parent=1 // pred_region
      %s668 = ssub.s32 128, 128
      %669 = vsyncadd [#allocation3], %s668
      %s671 = sshll.u32 [#allocation2], 4
      %s672 = int_to_ptr.vmem [resolvable:$true] %s671
      %674 = dma.vmem_to_hbm [thread:$0]  %s672, 128, %s4, [#allocation3]
    $region21: #{tpu_custom_call.1} parent=1 // pred_fallthru
      _
    // Predicated region
    $region22: #{tpu_custom_call.1} parent=1 // pred_check
      _
    $region23: #{tpu_custom_call.1} parent=1 // pred_check_branch
      %676 = sbr.rel (0) target = $region25
    $region24: #{tpu_custom_call.1} parent=1 // pred_region
      %677 = dma.done [#allocation3], 128
    $region25: #{tpu_custom_call.1} parent=1 // pred_fallthru
      _
    %678 = vsyncpa [#allocation3], 1

</llo_original>
